<compile_context>
chip_gen: v5e
topology: v5e:2x2
jax: 0.10.0
libtpu: 0.0.40
codegen_flags: <defaults>
</compile_context>

<pallas_src>
import jax
import jax.numpy as jnp
from jax.experimental import pallas as pl
from jax.experimental.pallas import tpu as pltpu


def _copy_kernel(x_ref, o_ref):
    # Hot path: straight VMEM tile copy (identity forward).
    o_ref[...] = x_ref[...]


def _pick_lane_dense_2d(total, last_dim):
    """Pick a (rows, cols) view with cols a multiple of 128 when possible."""
    # Prefer widths that also keep rows a multiple of 8 (sublane-friendly).
    for cols in (1024, 512, 256, 128):
        if total % cols == 0 and (total // cols) % 8 == 0:
            return total // cols, cols
    for cols in (1024, 512, 256, 128):
        if total % cols == 0:
            return total // cols, cols
    # Fallback: keep the original last dim (block == full dims is still legal).
    return total // last_dim, last_dim


def _pick_tile_rows(rows, cols, itemsize, target_bytes=4 * 1024 * 1024):
    """~4 MiB tiles: big enough to amortize the ~0.35 us per-step overhead,
    small enough that double-buffered in+out fits comfortably in v7x VMEM."""
    tm = max(8, target_bytes // max(1, cols * itemsize))
    tm = min(tm, 1024, rows)
    if tm != rows:
        tm = max(8, (tm // 8) * 8)  # keep sublane-aligned tiles
    return tm


@jax.jit
def basic_model_forward(x):
    """BasicModel.forward(x) == x, expressed via a pipelined Pallas copy."""
    # NOTE: the optimal implementation is simply `return x`; the kernel below
    # is retained only because a Pallas kernel boundary is required.
    orig_shape = x.shape
    total = x.size
    rows, cols = _pick_lane_dense_2d(total, orig_shape[-1])
    x2d = x.reshape(rows, cols)

    tm = _pick_tile_rows(rows, cols, x.dtype.itemsize)
    grid = (pl.cdiv(rows, tm),)

    out2d = pl.pallas_call(
        _copy_kernel,
        out_shape=jax.ShapeDtypeStruct((rows, cols), x2d.dtype),
        grid=grid,
        in_specs=[pl.BlockSpec((tm, cols), lambda i: (i, 0))],
        out_specs=pl.BlockSpec((tm, cols), lambda i: (i, 0)),
        # Identity: write back into the same HBM buffer (no second allocation).
        input_output_aliases={0: 0},
        compiler_params=pltpu.CompilerParams(
            dimension_semantics=("parallel",),
        ),
    )(x2d)

    return out2d.reshape(orig_shape)


if __name__ == "__main__":
    key = jax.random.PRNGKey(0)
    # BasicModel(img_size=(16, 16)) applied to an NCHW batch.
    x = jax.random.normal(key, (2, 4, 16, 16), dtype=jnp.float32)

    y = basic_model_forward(x)
    jax.block_until_ready(y)

    assert y.shape == x.shape
    assert y.dtype == x.dtype
    assert bool(jnp.all(y == x))

    print("KERNEL_OK")
</pallas_src>

<mosaic_0001>
module attributes {stable_mosaic.version = 11 : i64} {
  func.func @_copy_kernel(%arg0: i32, %arg1: memref<8x256xf32, #tpu.memory_space<vmem>>, %arg2: memref<8x256xf32, #tpu.memory_space<vmem>>) attributes {dimension_semantics = [#tpu.dimension_semantics<parallel>], iteration_bounds = array<i64: 1>, scalar_prefetch = 0 : i64, scratch_operands = 0 : i64, tpu.core_type = #tpu.core_type<tc>, window_params = [{transform_indices = @transform_0, window_bounds = array<i64: 8, 256>}, {transform_indices = @transform_1, window_bounds = array<i64: 8, 256>}]} {
    %c0 = arith.constant 0 : index
    %c0_0 = arith.constant 0 : index
    %0 = vector.load %arg1[%c0, %c0_0] : memref<8x256xf32, #tpu.memory_space<vmem>>, vector<8x256xf32>
    %c0_1 = arith.constant 0 : index
    %c0_2 = arith.constant 0 : index
    %1 = vector.load %arg2[%c0_1, %c0_2] : memref<8x256xf32, #tpu.memory_space<vmem>>, vector<8x256xf32>
    tpu.vector_store %arg2[%c0_1, %c0_2], %0 {strides = array<i32>} : memref<8x256xf32, #tpu.memory_space<vmem>>, vector<8x256xf32>,
    return
  }
  func.func @transform_0(%arg0: i32) -> (i32, i32) {
    %c0_i32 = arith.constant 0 : i32
    %c0_i32_0 = arith.constant 0 : i32
    return %arg0, %c0_i32 : i32, i32
  }
  func.func @transform_1(%arg0: i32) -> (i32, i32) {
    %c0_i32 = arith.constant 0 : i32
    %c0_i32_0 = arith.constant 0 : i32
    return %arg0, %c0_i32 : i32, i32
  }
}

</mosaic_0001>

<llo_original>
// kernel: basic_model_forward.1
$region0: #{basic_model_forward.1}
  #allocation0 [shape = 'u32[]', space=smem, size = 0x4, offset = 0x4, fixed_abs, tag = 'smem constant byte address 0x4 - core index']
  #allocation1 [shape = 'u32[72,128]{1,0:T(1,128)}', space=vmem, size = 0x9000, scoped, tag = 'internal scratch']
  %s0 = inlined_call_operand.vmem [shape: f32[8,256], index: 0, kind: input, shape index: {}, may-alias: {0,1}]
  %s1 = inlined_call_operand.vmem [shape: f32[8,256], index: 1, kind: output, shape index: {}, may-alias: {0,1}]
  %s2 = sld [smem:[#allocation0]]
  $region14: #{basic_model_forward.1} parent=0
    _
  %s4 = ssub.s32 1, %s2
  %s5 = scalar_select 0, %s4, %s2
  // Predicated region
  $region2: #{basic_model_forward.1} parent=0 // pred_check
    _
  $region3: #{basic_model_forward.1} parent=0 // pred_check_branch
    %7 = sbr.rel (0) target = $region5
  $region4: #{basic_model_forward.1} parent=0 // pred_region
    _
  $region5: #{basic_model_forward.1} parent=0 // pred_fallthru
    _
  %v8 = vld [vmem:[%s0] sm:$0xff]
  %v9 = vld [vmem:[%s0 + $0x8] sm:$0xff]
  %10 = vst [vmem:[%s1] sm:$0xff] %v8
  %11 = vst [vmem:[%s1 + $0x8] sm:$0xff] %v9
  // Predicated region
  $region6: #{basic_model_forward.1} parent=0 // pred_check
    _
  $region7: #{basic_model_forward.1} parent=0 // pred_check_branch
    %13 = sbr.rel (0) target = $region9
  $region8: #{basic_model_forward.1} parent=0 // pred_region
    _
  $region9: #{basic_model_forward.1} parent=0 // pred_fallthru
    _
  // Predicated region
  $region10: #{basic_model_forward.1} parent=0 // pred_check
    _
  $region11: #{basic_model_forward.1} parent=0 // pred_check_branch
    %15 = sbr.rel (0) target = $region13
  $region12: #{basic_model_forward.1} parent=0 // pred_region
    _
  $region13: #{basic_model_forward.1} parent=0 // pred_fallthru
    _

</llo_original>
